<compile_context>
chip_gen: v7x
topology: tpu7x:2x2x1
jax: 0.10.0
libtpu: 0.0.40
codegen_flags: <defaults>
</compile_context>

<pallas_src>
import functools

import numpy as np

import jax
import jax.numpy as jnp
from jax.experimental import pallas as pl
from jax.experimental.pallas import tpu as pltpu


_LANE = 128


def _cdiv(a, b):
    return -(-a // b)


def _round_up(a, b):
    return _cdiv(a, b) * b


# ---------------------------------------------------------------------------
# cls_mask from build_targets, fully on device (no host round trip).
# Only cls_mask influences the returned (loss, max_class_prob).
# TODO(synk): the remaining build_targets outputs (nGT, nCorrect, conf_mask,
#             coord_mask, tx/ty/tw/th/tconf/tcls) and the anchor_step==4
#             distance tie-break are data-dependent host loops in the
#             reference that do not feed the returned values; not materialized.
# ---------------------------------------------------------------------------
def _build_cls_mask(target, anchors_wh, nA, nH, nW):
    nB = target.shape[0]
    nT = min(50, target.shape[1] // 5)
    boxes = target[:, :nT * 5].reshape(nB, nT, 5)
    x = boxes[:, :, 1]
    y = boxes[:, :, 2]
    w = boxes[:, :, 3]
    h = boxes[:, :, 4]

    # zero-terminated GT list: box t is live iff x[0..t] are all nonzero
    live = jnp.cumprod((x != 0.0).astype(jnp.int32), axis=1).astype(jnp.float32)

    gx = x * nW
    gy = y * nH
    gw = w * nW
    gh = h * nH
    gi = jnp.clip(gx.astype(jnp.int32), 0, nW - 1)
    gj = jnp.clip(gy.astype(jnp.int32), 0, nH - 1)

    # anchor/GT IoU on (w, h) only, both boxes centered at the origin
    aw = anchors_wh[:, 0][None, None, :]                      # (1, 1, nA)
    ah = anchors_wh[:, 1][None, None, :]
    inter = jnp.minimum(aw, gw[:, :, None]) * jnp.minimum(ah, gh[:, :, None])
    union = aw * ah + (gw * gh)[:, :, None] - inter
    iou = inter / union                                       # (nB, nT, nA)
    best_n = jnp.argmax(iou, axis=-1).astype(jnp.int32)       # first max == strict '>'
    # reference keeps best_n == -1 (-> last anchor) if no IoU exceeds 0
    best_n = jnp.where(jnp.max(iou, axis=-1) > 0.0, best_n, nA - 1)

    b_idx = jnp.arange(nB, dtype=jnp.int32)[:, None]
    flat = ((b_idx * nA + best_n) * nH + gj) * nW + gi        # (nB, nT)

    mask = jnp.zeros((nB * nA * nH * nW,), jnp.float32)
    mask = mask.at[flat.reshape(-1)].max(live.reshape(-1))
    return mask                                               # (b, a, j, i) order


# ---------------------------------------------------------------------------
# Blindness-attack loss kernel.
# Columns are cells (channel-major layout, col = ((b*nA+a)*nH + j)*nW + i),
# rows are class logits. Grid = (chunks_parallel, tiles_arbitrary).
# ---------------------------------------------------------------------------
def _blindness_kernel(idx_ref, cls_ref, mask_ref, sum_ref, max_ref,
                      sum_acc, max_acc):
    k = pl.program_id(1)

    @pl.when(k == 0)
    def _():
        sum_acc[...] = jnp.zeros_like(sum_acc)
        max_acc[...] = jnp.full_like(max_acc, -jnp.inf)

    logits = cls_ref[...].astype(jnp.float32)                 # (nC, T)
    m = jnp.max(logits, axis=0, keepdims=True)                # (1, T)  XLU
    e = jnp.exp(logits - m)                                   # EUP
    denom = jnp.sum(e, axis=0, keepdims=True)                 # (1, T)  XLU

    # softmax prob of the blindness class only: dynamic row slice, no one-hot,
    # approx reciprocal lands on the otherwise-idle EUP slot.
    idx = idx_ref[0]
    blind_logit = cls_ref[pl.ds(idx, 1), :].astype(jnp.float32)   # (1, T)
    blind = jnp.exp(blind_logit - m) * pl.reciprocal(denom, approx=True)

    msk = mask_ref[...]                                       # (1, T) f32
    sum_acc[...] = sum_acc[...] + blind * msk
    max_acc[...] = jnp.maximum(max_acc[...],
                               jnp.where(msk > 0.0, blind, -jnp.inf))

    # epilogue: single cross-lane reduction + scalar store per chunk
    @pl.when(k == pl.num_programs(1) - 1)
    def _():
        sum_ref[...] = jnp.sum(sum_acc[...]).reshape(1, 1, 1)
        max_ref[...] = jnp.max(max_acc[...]).reshape(1, 1, 1)


def _choose_tiling(nC, N, target_tile=8192, vmem_budget=12 * 1024 * 1024):
    # bytes per lane column of the double-buffered (cls + mask) f32 blocks
    bytes_per_lane = (nC + 1) * 4 * 2
    tile_cap = max(_LANE, (vmem_budget // bytes_per_lane) // _LANE * _LANE)
    tile = max(_LANE, min(target_tile, tile_cap, _round_up(N, _LANE)))
    n_tiles = _cdiv(N, tile)
    num_chunks = 2 if n_tiles >= 2 else 1   # megacore split on v7x; harmless on 1-TC parts
    steps = _cdiv(n_tiles, num_chunks)
    return tile, num_chunks, steps, num_chunks * steps * tile


def blindness_loss_pallas(cls_t, mask, blind_idx_arr):
    nC, N = cls_t.shape
    tile, num_chunks, steps, n_pad = _choose_tiling(nC, N)
    if n_pad != N:
        # padded columns: zero logits (finite softmax) and zero mask -> no effect
        cls_t = jnp.pad(cls_t, ((0, 0), (0, n_pad - N)))
        mask = jnp.pad(mask, ((0, 0), (0, n_pad - N)))

    grid_spec = pltpu.PrefetchScalarGridSpec(
        num_scalar_prefetch=1,
        grid=(num_chunks, steps),
        in_specs=[
            pl.BlockSpec((nC, tile), lambda c, k, idx: (0, c * steps + k)),
            pl.BlockSpec((1, tile), lambda c, k, idx: (0, c * steps + k)),
        ],
        out_specs=(
            pl.BlockSpec((1, 1, 1), lambda c, k, idx: (c, 0, 0)),
            pl.BlockSpec((1, 1, 1), lambda c, k, idx: (c, 0, 0)),
        ),
        scratch_shapes=[
            pltpu.VMEM((1, tile), jnp.float32),   # partial sums per lane
            pltpu.VMEM((1, tile), jnp.float32),   # partial maxes per lane
        ],
    )

    sums, maxes = pl.pallas_call(
        _blindness_kernel,
        out_shape=(jax.ShapeDtypeStruct((num_chunks, 1, 1), jnp.float32),
                   jax.ShapeDtypeStruct((num_chunks, 1, 1), jnp.float32)),
        grid_spec=grid_spec,
        compiler_params=pltpu.CompilerParams(
            dimension_semantics=("parallel", "arbitrary"),
            vmem_limit_bytes=32 * 1024 * 1024),
    )(blind_idx_arr, cls_t, mask)

    return jnp.sum(sums), jnp.max(maxes)


# ---------------------------------------------------------------------------
# Jitted forward: one layout op (slice+transpose of the class slab), on-device
# cls_mask, one pallas_call. pred_boxes / build_targets side outputs are not
# computed because they never feed the returned (loss, max_class_prob).
# ---------------------------------------------------------------------------
@functools.partial(jax.jit, static_argnames=("nA", "nC"))
def _forward(output, target, blind_idx_arr, anchors_wh, *, nA, nC):
    nB, _, nH, nW = output.shape
    N = nB * nA * nH * nW
    out5 = output.reshape(nB, nA, 5 + nC, nH, nW)
    # channel-major class logits: col = ((b*nA + a)*nH + j)*nW + i
    cls_t = jnp.transpose(out5[:, :, 5:5 + nC], (2, 0, 1, 3, 4)).reshape(nC, N)
    mask = _build_cls_mask(target, anchors_wh, nA, nH, nW).reshape(1, N)
    s, mx = blindness_loss_pallas(cls_t, mask, blind_idx_arr)
    # nn.L1Loss(size_average=True)(sum_probs, 0) == |sum_probs|
    return jnp.abs(s), mx


class RegionLossBlindnessAttackPallas:
    def __init__(self, num_classes=0, anchors=(), num_anchors=1):
        self.num_classes = num_classes
        self.anchors = list(anchors)
        self.num_anchors = num_anchors
        self.anchor_step = len(self.anchors) // num_anchors
        self.coord_scale = 1
        self.noobject_scale = 1
        self.object_scale = 5
        self.class_scale = 1
        self.thresh = 0.6
        self.seen = 0
        anc = np.asarray(self.anchors, dtype=np.float32).reshape(
            num_anchors, self.anchor_step)
        self._anchors_wh = jnp.asarray(anc[:, :2])    # cached on device once

    def __call__(self, output, target, blindness_class_index):
        blind_idx_arr = jnp.asarray([blindness_class_index], dtype=jnp.int32)
        loss, max_class_prob = _forward(
            output, target, blind_idx_arr, self._anchors_wh,
            nA=self.num_anchors, nC=self.num_classes)
        # Note: max_class_prob is -inf when cls_mask has no set cell (the
        # PyTorch reference would raise on max() over an empty selection).
        return loss, max_class_prob


# ---------------------------------------------------------------------------
# Pure-jnp reference for a sanity check of the Pallas kernel math.
# ---------------------------------------------------------------------------
def _reference_jnp(output, target, anchors_wh, nA, nC, blind_idx):
    nB, _, nH, nW = output.shape
    N = nB * nA * nH * nW
    out5 = output.reshape(nB, nA, 5 + nC, nH, nW)
    cls_t = jnp.transpose(out5[:, :, 5:5 + nC], (2, 0, 1, 3, 4)).reshape(nC, N)
    mask = _build_cls_mask(target, anchors_wh, nA, nH, nW).reshape(1, N)
    probs = jax.nn.softmax(cls_t.astype(jnp.float32), axis=0)
    blind = probs[blind_idx:blind_idx + 1]
    s = jnp.sum(blind * mask)
    mx = jnp.max(jnp.where(mask > 0, blind, -jnp.inf))
    return jnp.abs(s), mx


# ---------------------------------------------------------------------------
if __name__ == "__main__":
    key = jax.random.PRNGKey(0)

    nB, nA, nC, nH, nW = 2, 5, 4, 8, 8
    anchors = [1.08, 1.19, 3.42, 4.41, 6.63, 11.38, 9.42, 5.11, 16.62, 10.52]

    # deterministic "network output": (nB, nA*(5+nC), nH, nW) in NCHW
    output = jax.random.normal(key, (nB, nA * (5 + nC), nH, nW),
                               dtype=jnp.float32)

    # target: (nB, 250) = up to 50 boxes of (cls, x, y, w, h), zero-terminated
    target = np.zeros((nB, 250), dtype=np.float32)
    target[0, 0:5] = [1.0, 0.30, 0.40, 0.20, 0.30]
    target[0, 5:10] = [2.0, 0.70, 0.60, 0.50, 0.40]
    target[1, 0:5] = [0.0, 0.55, 0.25, 0.10, 0.15]
    target = jnp.asarray(target)

    module = RegionLossBlindnessAttackPallas(num_classes=nC, anchors=anchors,
                                             num_anchors=nA)
    loss, max_prob = module(output, target, blindness_class_index=2)
    jax.block_until_ready((loss, max_prob))

    # sanity check vs. pure-jnp reference (loose tol: approx reciprocal in-kernel)
    ref_loss, ref_max = _reference_jnp(output, target, module._anchors_wh,
                                       nA, nC, 2)
    np.testing.assert_allclose(np.asarray(loss), np.asarray(ref_loss),
                               rtol=1e-2, atol=1e-5)
    np.testing.assert_allclose(np.asarray(max_prob), np.asarray(ref_max),
                               rtol=1e-2, atol=1e-5)

    print("KERNEL_OK")
</pallas_src>

<mosaic_0001>
module attributes {stable_mosaic.version = 11 : i64} {
  func.func @_blindness_kernel(%arg0: i32, %arg1: i32, %arg2: memref<1xi32, #tpu.memory_space<smem>>, %arg3: memref<4x640xf32, #tpu.memory_space<vmem>>, %arg4: memref<1x640xf32, #tpu.memory_space<vmem>>, %arg5: memref<1x1x1xf32, #tpu.memory_space<vmem>>, %arg6: memref<1x1x1xf32, #tpu.memory_space<vmem>>, %arg7: memref<1x640xf32, #tpu.memory_space<vmem>>, %arg8: memref<1x640xf32, #tpu.memory_space<vmem>>) attributes {dimension_semantics = [#tpu.dimension_semantics<parallel>, #tpu.dimension_semantics<arbitrary>], iteration_bounds = array<i64: 1, 1>, scalar_prefetch = 1 : i64, scratch_operands = 2 : i64, tpu.core_type = #tpu.core_type<tc>, window_params = [{transform_indices = @transform_0, window_bounds = array<i64: 4, 640>}, {transform_indices = @transform_1, window_bounds = array<i64: 1, 640>}, {transform_indices = @transform_2, window_bounds = array<i64: 1, 1, 1>}, {transform_indices = @transform_3, window_bounds = array<i64: 1, 1, 1>}]} {
    %c0_i32 = arith.constant 0 : i32
    %0 = arith.cmpi eq, %arg1, %c0_i32 : i32
    %1 = arith.extui %0 : i1 to i32
    %c0_i32_0 = arith.constant 0 : i32
    %2 = arith.cmpi ne, %1, %c0_i32_0 : i32
    scf.if %2 {
      %cst_19 = arith.constant 0.000000e+00 : f32
      %33 = vector.broadcast %cst_19 : f32 to vector<1x640xf32>
      %c0_20 = arith.constant 0 : index
      %c0_21 = arith.constant 0 : index
      %34 = vector.load %arg7[%c0_20, %c0_21] : memref<1x640xf32, #tpu.memory_space<vmem>>, vector<1x640xf32>
      tpu.vector_store %arg7[%c0_20, %c0_21], %33 {strides = array<i32>} : memref<1x640xf32, #tpu.memory_space<vmem>>, vector<1x640xf32>,
      %cst_22 = arith.constant 0xFF800000 : f32
      %35 = vector.broadcast %cst_22 : f32 to vector<1x640xf32>
      %c0_23 = arith.constant 0 : index
      %c0_24 = arith.constant 0 : index
      %36 = vector.load %arg8[%c0_23, %c0_24] : memref<1x640xf32, #tpu.memory_space<vmem>>, vector<1x640xf32>
      tpu.vector_store %arg8[%c0_23, %c0_24], %35 {strides = array<i32>} : memref<1x640xf32, #tpu.memory_space<vmem>>, vector<1x640xf32>,
    } else {
    }
    %c0 = arith.constant 0 : index
    %c0_1 = arith.constant 0 : index
    %3 = vector.load %arg3[%c0, %c0_1] : memref<4x640xf32, #tpu.memory_space<vmem>>, vector<4x640xf32>
    %cst = arith.constant dense<0xFF800000> : vector<640xf32>
    %4 = vector.multi_reduction <maximumf>, %3, %cst [0] : vector<4x640xf32> to vector<640xf32>
    %5 = vector.shape_cast %4 : vector<640xf32> to vector<1x640xf32>
    %6 = vector.broadcast %5 : vector<1x640xf32> to vector<4x640xf32>
    %7 = arith.subf %3, %6 : vector<4x640xf32>
    %8 = math.exp %7 : vector<4x640xf32>
    %cst_2 = arith.constant dense<0.000000e+00> : vector<640xf32>
    %9 = vector.multi_reduction <add>, %8, %cst_2 [0] : vector<4x640xf32> to vector<640xf32>
    %10 = vector.shape_cast %9 : vector<640xf32> to vector<1x640xf32>
    %c0_3 = arith.constant 0 : index
    %11 = memref.load %arg2[%c0_3] : memref<1xi32, #tpu.memory_space<smem>>
    %12 = arith.index_cast %11 : i32 to index
    %c0_4 = arith.constant 0 : index
    %13 = vector.load %arg3[%12, %c0_4] : memref<4x640xf32, #tpu.memory_space<vmem>>, vector<1x640xf32>
    %14 = arith.subf %13, %5 : vector<1x640xf32>
    %15 = math.exp %14 : vector<1x640xf32>
    %16 = tpu.reciprocal %10 {approx = true} : vector<1x640xf32> -> vector<1x640xf32>
    %17 = arith.mulf %15, %16 : vector<1x640xf32>
    %c0_5 = arith.constant 0 : index
    %c0_6 = arith.constant 0 : index
    %18 = vector.load %arg4[%c0_5, %c0_6] : memref<1x640xf32, #tpu.memory_space<vmem>>, vector<1x640xf32>
    %c0_7 = arith.constant 0 : index
    %c0_8 = arith.constant 0 : index
    %19 = vector.load %arg7[%c0_7, %c0_8] : memref<1x640xf32, #tpu.memory_space<vmem>>, vector<1x640xf32>
    %20 = arith.mulf %17, %18 : vector<1x640xf32>
    %21 = arith.addf %19, %20 : vector<1x640xf32>
    %c0_9 = arith.constant 0 : index
    %c0_10 = arith.constant 0 : index
    %22 = vector.load %arg7[%c0_9, %c0_10] : memref<1x640xf32, #tpu.memory_space<vmem>>, vector<1x640xf32>
    tpu.vector_store %arg7[%c0_9, %c0_10], %21 {strides = array<i32>} : memref<1x640xf32, #tpu.memory_space<vmem>>, vector<1x640xf32>,
    %c0_11 = arith.constant 0 : index
    %c0_12 = arith.constant 0 : index
    %23 = vector.load %arg8[%c0_11, %c0_12] : memref<1x640xf32, #tpu.memory_space<vmem>>, vector<1x640xf32>
    %cst_13 = arith.constant 0.000000e+00 : f32
    %24 = vector.broadcast %cst_13 : f32 to vector<1x640xf32>
    %25 = arith.cmpf ogt, %18, %24 : vector<1x640xf32>
    %cst_14 = arith.constant 0xFF800000 : f32
    %26 = vector.broadcast %cst_14 : f32 to vector<1x640xf32>
    %27 = arith.select %25, %17, %26 : vector<1x640xi1>, vector<1x640xf32>
    %28 = arith.maximumf %23, %27 : vector<1x640xf32>
    %c0_15 = arith.constant 0 : index
    %c0_16 = arith.constant 0 : index
    %29 = vector.load %arg8[%c0_15, %c0_16] : memref<1x640xf32, #tpu.memory_space<vmem>>, vector<1x640xf32>
    tpu.vector_store %arg8[%c0_15, %c0_16], %28 {strides = array<i32>} : memref<1x640xf32, #tpu.memory_space<vmem>>, vector<1x640xf32>,
    %c0_i32_17 = arith.constant 0 : i32
    %30 = arith.cmpi eq, %arg1, %c0_i32_17 : i32
    %31 = arith.extui %30 : i1 to i32
    %c0_i32_18 = arith.constant 0 : i32
    %32 = arith.cmpi ne, %31, %c0_i32_18 : i32
    scf.if %32 {
      %c0_19 = arith.constant 0 : index
      %c0_20 = arith.constant 0 : index
      %33 = vector.load %arg7[%c0_19, %c0_20] : memref<1x640xf32, #tpu.memory_space<vmem>>, vector<1x640xf32>
      %34 = vector.shape_cast %33 : vector<1x640xf32> to vector<1x1x640xf32>
      %cst_21 = arith.constant dense<0.000000e+00> : vector<1xf32>
      %35 = vector.multi_reduction <add>, %34, %cst_21 [1, 2] : vector<1x1x640xf32> to vector<1xf32>
      %36 = vector.shape_cast %35 : vector<1xf32> to vector<1x1x1xf32>
      %37 = vector.extract %36[0, 0, 0] : f32 from vector<1x1x1xf32>
      %38 = vector.broadcast %37 : f32 to vector<1x1x1xf32>
      %c0_22 = arith.constant 0 : index
      %c0_23 = arith.constant 0 : index
      %c0_24 = arith.constant 0 : index
      %39 = vector.load %arg5[%c0_22, %c0_23, %c0_24] : memref<1x1x1xf32, #tpu.memory_space<vmem>>, vector<1x1x1xf32>
      tpu.vector_store %arg5[%c0_22, %c0_23, %c0_24], %38 {strides = array<i32>} : memref<1x1x1xf32, #tpu.memory_space<vmem>>, vector<1x1x1xf32>,
      %c0_25 = arith.constant 0 : index
      %c0_26 = arith.constant 0 : index
      %40 = vector.load %arg8[%c0_25, %c0_26] : memref<1x640xf32, #tpu.memory_space<vmem>>, vector<1x640xf32>
      %41 = vector.shape_cast %40 : vector<1x640xf32> to vector<1x1x640xf32>
      %cst_27 = arith.constant dense<0xFF800000> : vector<1xf32>
      %42 = vector.multi_reduction <maximumf>, %41, %cst_27 [1, 2] : vector<1x1x640xf32> to vector<1xf32>
      %43 = vector.shape_cast %42 : vector<1xf32> to vector<1x1x1xf32>
      %44 = vector.extract %43[0, 0, 0] : f32 from vector<1x1x1xf32>
      %45 = vector.broadcast %44 : f32 to vector<1x1x1xf32>
      %c0_28 = arith.constant 0 : index
      %c0_29 = arith.constant 0 : index
      %c0_30 = arith.constant 0 : index
      %46 = vector.load %arg6[%c0_28, %c0_29, %c0_30] : memref<1x1x1xf32, #tpu.memory_space<vmem>>, vector<1x1x1xf32>
      tpu.vector_store %arg6[%c0_28, %c0_29, %c0_30], %45 {strides = array<i32>} : memref<1x1x1xf32, #tpu.memory_space<vmem>>, vector<1x1x1xf32>,
    } else {
    }
    return
  }
  func.func @transform_0(%arg0: i32, %arg1: i32, %arg2: memref<1xi32, #tpu.memory_space<smem>>) -> (i32, i32) {
    %c1_i32 = arith.constant 1 : i32
    %0 = arith.muli %arg0, %c1_i32 : i32
    %1 = arith.addi %0, %arg1 : i32
    %c0_i32 = arith.constant 0 : i32
    %c0_i32_0 = arith.constant 0 : i32
    return %c0_i32, %1 : i32, i32
  }
  func.func @transform_1(%arg0: i32, %arg1: i32, %arg2: memref<1xi32, #tpu.memory_space<smem>>) -> (i32, i32) {
    %c1_i32 = arith.constant 1 : i32
    %0 = arith.muli %arg0, %c1_i32 : i32
    %1 = arith.addi %0, %arg1 : i32
    %c0_i32 = arith.constant 0 : i32
    %c0_i32_0 = arith.constant 0 : i32
    return %c0_i32, %1 : i32, i32
  }
  func.func @transform_2(%arg0: i32, %arg1: i32, %arg2: memref<1xi32, #tpu.memory_space<smem>>) -> (i32, i32, i32) {
    %c0_i32 = arith.constant 0 : i32
    %c0_i32_0 = arith.constant 0 : i32
    %c0_i32_1 = arith.constant 0 : i32
    return %arg0, %c0_i32, %c0_i32_0 : i32, i32, i32
  }
  func.func @transform_3(%arg0: i32, %arg1: i32, %arg2: memref<1xi32, #tpu.memory_space<smem>>) -> (i32, i32, i32) {
    %c0_i32 = arith.constant 0 : i32
    %c0_i32_0 = arith.constant 0 : i32
    %c0_i32_1 = arith.constant 0 : i32
    return %arg0, %c0_i32, %c0_i32_0 : i32, i32, i32
  }
}

</mosaic_0001>

<llo_original>
// kernel: _forward.1
$region0: #{_forward.1}
  #allocation0 [shape = 'u32[]', space=smem, size = 0x4, offset = 0x4, fixed_abs, tag = 'smem constant byte address 0x4 - core index']
  #allocation1 [shape = 'u32[144,128]{1,0:T(1,128)}', space=vmem, size = 0x12000, scoped, tag = 'internal scratch']
  #allocation2 [shape = 'f32[1,640]{1,0:T(1,128)}', space=vmem, size = 0xa00, scoped, tag = 'scratch operand']
  #allocation3 [shape = 'f32[1,640]{1,0:T(1,128)}', space=vmem, size = 0xa00, scoped, tag = 'scratch operand']
  #allocation4 [shape = 's32[1]{0}', space=sflag, size = 0x4, scoped, tag = 'scoped memory for _forward.1']
  #allocation5 [shape = 's32[1]{0:T(128)S(6)}', space=smem, size = 0x200, scoped, tag = 'prefetched SMEM operand 0']
  %s0 = inlined_call_operand.<no memory space> [shape: s32[1], index: 0, kind: input, shape index: {}]
  %s1 = inlined_call_operand.vmem [shape: f32[4,640], index: 1, kind: input, shape index: {}]
  %s2 = inlined_call_operand.vmem [shape: f32[1,640], index: 2, kind: input, shape index: {}]
  %s3 = inlined_call_operand.hbm [shape: f32[1,1,1], index: 3, kind: output, shape index: {0}]
  %s4 = inlined_call_operand.hbm [shape: f32[1,1,1], index: 4, kind: output, shape index: {1}]
  %5 = xla_tuple %s3, %s4
  %s6 = sld [smem:[#allocation0]]
  $region34: #{_forward.1} parent=0
    _
  %s8 = ssub.s32 1, %s6
  %s9 = scalar_select 0, %s8, %s6
  %10 = sst [smem:[#allocation5]] %s0
  $region1: #{_forward.1} parent=0
    #allocation6 [shape = 'u8[512]{0}', space=vmem, size = 0x400, scoped, tag = 'output window, operand 0, single buffered']
    #allocation7 [shape = 's32[1]{0}', space=sflag, size = 0x4, scoped, tag = 'scoped memory for _forward.1']
    #allocation8 [shape = 'u8[512]{0}', space=vmem, size = 0x400, scoped, tag = 'output window, operand 1, single buffered']
    #allocation9 [shape = 's32[1]{0}', space=sflag, size = 0x4, scoped, tag = 'scoped memory for _forward.1']
    %11 = vsyncpa [#allocation7], 0
    %12 = vsyncpa [#allocation9], 0
    // Predicated region
    $region2: #{_forward.1} parent=1 // pred_check
      _
    $region3: #{_forward.1} parent=1 // pred_check_branch
      %14 = sbr.rel (0) target = $region5
    $region4: #{_forward.1} parent=1 // pred_region
      %s15 = sadd.s32 0, 0
      %s16 = smul.u32 5, %s15
      %p17 = scmp.lt.s32.totalorder %s16, 4
      %s18 = scalar_select %p17, %s16, 4
      %s19 = smul.addr %s18, 4
      %s20 = scalar_lea.vmem %s1, %s19
      %s21 = sadd.s32 0, 0
      %s22 = smul.u32 5, %s21
    $region5: #{_forward.1} parent=1 // pred_fallthru
      _
    // Predicated region
    $region6: #{_forward.1} parent=1 // pred_check
      _
    $region7: #{_forward.1} parent=1 // pred_check_branch
      %24 = sbr.rel (0) target = $region9
    $region8: #{_forward.1} parent=1 // pred_region
      %s25 = sadd.s32 0, 0
      %s26 = smul.u32 5, %s25
      %p27 = scmp.lt.s32.totalorder %s26, 4
      %s28 = scalar_select %p27, %s26, 4
      %s29 = scalar_lea.vmem %s2, %s28
      %s30 = sadd.s32 0, 0
      %s31 = smul.u32 5, %s30
    $region9: #{_forward.1} parent=1 // pred_fallthru
      _
    %s32 = sadd.s32 0, 0
    %s33 = smul.u32 5, %s32
    %p34 = scmp.lt.s32.totalorder %s33, 4
    %s35 = scalar_select %p34, %s33, 4
    %s36 = smul.addr %s35, 4
    %s37 = scalar_lea.vmem %s1, %s36
    %s38 = sadd.s32 0, 0
    %s39 = smul.u32 5, %s38
    %p40 = scmp.lt.s32.totalorder %s39, 4
    %s41 = scalar_select %p40, %s39, 4
    %s42 = scalar_lea.vmem %s2, %s41
    %s43 = sadd.s32 0, 0
    %s44 = smul.u32 5, %s43
    %p45 = scmp.lt.s32.totalorder %s44, 4
    %s46 = scalar_select %p45, %s44, 4
    %s47 = smul.addr %s46, 4
    %s48 = scalar_lea.vmem %s1, %s47
    %s49 = sadd.s32 0, 0
    %s50 = smul.u32 5, %s49
    %s51 = sadd.s32 0, 0
    %s52 = smul.u32 5, %s51
    %p53 = scmp.lt.s32.totalorder %s52, 4
    %s54 = scalar_select %p53, %s52, 4
    %s55 = scalar_lea.vmem %s2, %s54
    %s56 = sadd.s32 0, 0
    %s57 = smul.u32 5, %s56
    %p58 = scmp.eq.s32.totalorder 0, 0
    // Predicated region
    $region10: #{_forward.1} parent=1 // pred_check
      %p59 = pneg %p58
    $region11: #{_forward.1} parent=1 // pred_check_branch
      %61 = sbr.rel (%p59) target = $region13
    $region12: #{_forward.1} parent=1 // pred_region
      %v62 = vlaneseq
      %vm63 = vcmp.ge.s32.totalorder %v62, 0
      %vm64 = vcmp.lt.s32.totalorder %v62, 640
      %vm65 = vmand %vm63, %vm64
      %66 = vst.msk [vmem:[#allocation2] sm:$0x1f] %vm65, 0.0
      %67 = vst.msk [vmem:[#allocation3] sm:$0x1f] %vm65, -inf
    $region13: #{_forward.1} parent=1 // pred_fallthru
      _
    %v68 = vld [vmem:[%s48] sm:$0xff]
    %v69 = vld [vmem:[%s48 + $0x8] sm:$0xff]
    %v70 = vld [vmem:[%s48 + $0x10] sm:$0xf]
    %v73 = vcombine.high %v68, %v68
    %v74 = vcombine.high %v69, %v69
    %vm77 = vcmask 1043456
    %v78 = vsel %vm77, %v68, -inf
    %v79 = vrot.slane %v78, 4
    %v80 = vmax.f32 %v78, %v79
    %v81 = vrot.slane %v80, 2
    %v82 = vmax.f32 %v80, %v81
    %v83 = vrot.slane %v82, 1
    %v84 = vmax.f32 %v82, %v83
    %v85 = vsel %vm77, %v73, -inf
    %v86 = vrot.slane %v85, 4
    %v87 = vmax.f32 %v85, %v86
    %v88 = vrot.slane %v87, 2
    %v89 = vmax.f32 %v87, %v88
    %v90 = vrot.slane %v89, 1
    %v91 = vmax.f32 %v89, %v90
    %v92 = vsel %vm77, %v69, -inf
    %v93 = vrot.slane %v92, 4
    %v94 = vmax.f32 %v92, %v93
    %v95 = vrot.slane %v94, 2
    %v96 = vmax.f32 %v94, %v95
    %v97 = vrot.slane %v96, 1
    %v98 = vmax.f32 %v96, %v97
    %v99 = vsel %vm77, %v74, -inf
    %v100 = vrot.slane %v99, 4
    %v101 = vmax.f32 %v99, %v100
    %v102 = vrot.slane %v101, 2
    %v103 = vmax.f32 %v101, %v102
    %v104 = vrot.slane %v103, 1
    %v105 = vmax.f32 %v103, %v104
    %v106 = vsel %vm77, %v70, -inf
    %v107 = vrot.slane %v106, 4
    %v108 = vmax.f32 %v106, %v107
    %v109 = vrot.slane %v108, 2
    %v110 = vmax.f32 %v108, %v109
    %v111 = vrot.slane %v110, 1
    %v112 = vmax.f32 %v110, %v111
    %v118 = vcombine.low %v84, %v91
    %v119 = vcombine.low %v98, %v105
    %v122 = vsub.f32 %v68, %v118
    %v123 = vsub.f32 %v69, %v119
    %v124 = vsub.f32 %v70, %v112
    %v125 = vmul.f32 %v122, 1.442695
    %v126 = vpow.pop %v125
    %v127 = vmul.f32 %v123, 1.442695
    %v128 = vpow.pop %v127
    %v129 = vmul.f32 %v124, 1.442695
    %v130 = vpow.pop %v129
    %v133 = vcombine.high %v126, %v126
    %v134 = vcombine.high %v128, %v128
    %v137 = vsel %vm77, %v126, 0.0
    %v138 = vrot.slane %v137, 4
    %v139 = vadd.f32 %v137, %v138
    %v140 = vrot.slane %v139, 2
    %v141 = vadd.f32 %v139, %v140
    %v142 = vrot.slane %v141, 1
    %v143 = vadd.f32 %v141, %v142
    %v144 = vsel %vm77, %v133, 0.0
    %v145 = vrot.slane %v144, 4
    %v146 = vadd.f32 %v144, %v145
    %v147 = vrot.slane %v146, 2
    %v148 = vadd.f32 %v146, %v147
    %v149 = vrot.slane %v148, 1
    %v150 = vadd.f32 %v148, %v149
    %v151 = vsel %vm77, %v128, 0.0
    %v152 = vrot.slane %v151, 4
    %v153 = vadd.f32 %v151, %v152
    %v154 = vrot.slane %v153, 2
    %v155 = vadd.f32 %v153, %v154
    %v156 = vrot.slane %v155, 1
    %v157 = vadd.f32 %v155, %v156
    %v158 = vsel %vm77, %v134, 0.0
    %v159 = vrot.slane %v158, 4
    %v160 = vadd.f32 %v158, %v159
    %v161 = vrot.slane %v160, 2
    %v162 = vadd.f32 %v160, %v161
    %v163 = vrot.slane %v162, 1
    %v164 = vadd.f32 %v162, %v163
    %v165 = vsel %vm77, %v130, 0.0
    %v166 = vrot.slane %v165, 4
    %v167 = vadd.f32 %v165, %v166
    %v168 = vrot.slane %v167, 2
    %v169 = vadd.f32 %v167, %v168
    %v170 = vrot.slane %v169, 1
    %v171 = vadd.f32 %v169, %v170
    %s172 = sld [smem:[#allocation5]]
    %s173 = sshra.s32 %s172, 2
    %s174 = sand.u32 %s172, 3
    %s175 = sshra.s32 %s172, 2
    %s176 = sand.u32 %s172, 3
    %s177 = smul.u32 %s173, 5
    %s178 = smul.u32 %s177, 4
    %s179 = sadd.s32 %s178, %s176
    %s180 = scalar_lea.vmem %s48, %s179
    %v181 = vld [vmem:[%s180] ss:$4 sm:$0x1f]
    %v183 = vunpack.c.l.s4 1966171168
    %v184 = vunpack.c.0.s8 %v183
    %v185 = vlaneseq
    %v186 = vshrl.u32 %v185, 7
    %v187 = vsub.s32 %v184, %v186
    %v188 = vrot.slane %v118, %v187
    %v190 = vunpack.c.l.s4 1966171168
    %v191 = vunpack.c.0.s8 %v190
    %v192 = vlaneseq
    %v193 = vshrl.u32 %v192, 7
    %v194 = vsub.s32 %v191, %v193
    %v195 = vrot.slane %v119, %v194
    %v197 = vunpack.c.l.s4 1966171168
    %v198 = vunpack.c.0.s8 %v197
    %v199 = vlaneseq
    %v200 = vshrl.u32 %v199, 7
    %v201 = vsub.s32 %v198, %v200
    %v202 = vrot.slane %v112, %v201
    %v203 = vcombine.low %v188, %v195
    %v205 = vunpack.c.l.s4 1966171168
    %v206 = vunpack.c.0.s8 %v205
    %v207 = vlaneseq
    %v208 = vshrl.u32 %v207, 7
    %v209 = vsub.s32 %v206, %v208
    %v210 = vrot.slane %v203, %v209
    %v212 = vunpack.c.l.s4 1966171168
    %v213 = vunpack.c.0.s8 %v212
    %v214 = vlaneseq
    %v215 = vshrl.u32 %v214, 7
    %v216 = vsub.s32 %v213, %v215
    %v217 = vrot.slane %v202, %v216
    %v218 = vcombine.low %v210, %v217
    %v220 = vsub.f32 %v181, %v218
    %v221 = vmul.f32 %v220, 1.442695
    %v222 = vpow.pop %v221
    %v223 = vrcp.pop %v143
    %v224 = vrcp.pop %v150
    %v225 = vrcp.pop %v157
    %v226 = vrcp.pop %v164
    %v227 = vrcp.pop %v171
    %v233 = vcombine.low %v223, %v224
    %v234 = vcombine.low %v225, %v226
    %v236 = vunpack.c.l.s4 1966171168
    %v237 = vunpack.c.0.s8 %v236
    %v238 = vlaneseq
    %v239 = vshrl.u32 %v238, 7
    %v240 = vsub.s32 %v237, %v239
    %v241 = vrot.slane %v233, %v240
    %v243 = vunpack.c.l.s4 1966171168
    %v244 = vunpack.c.0.s8 %v243
    %v245 = vlaneseq
    %v246 = vshrl.u32 %v245, 7
    %v247 = vsub.s32 %v244, %v246
    %v248 = vrot.slane %v234, %v247
    %v250 = vunpack.c.l.s4 1966171168
    %v251 = vunpack.c.0.s8 %v250
    %v252 = vlaneseq
    %v253 = vshrl.u32 %v252, 7
    %v254 = vsub.s32 %v251, %v253
    %v255 = vrot.slane %v227, %v254
    %v256 = vcombine.low %v241, %v248
    %v258 = vunpack.c.l.s4 1966171168
    %v259 = vunpack.c.0.s8 %v258
    %v260 = vlaneseq
    %v261 = vshrl.u32 %v260, 7
    %v262 = vsub.s32 %v259, %v261
    %v263 = vrot.slane %v256, %v262
    %v265 = vunpack.c.l.s4 1966171168
    %v266 = vunpack.c.0.s8 %v265
    %v267 = vlaneseq
    %v268 = vshrl.u32 %v267, 7
    %v269 = vsub.s32 %v266, %v268
    %v270 = vrot.slane %v255, %v269
    %v271 = vcombine.low %v263, %v270
    %v273 = vmul.f32 %v222, %v271
    %v274 = vld [vmem:[%s55] sm:$0x1f]
    %v275 = vld [vmem:[#allocation2] sm:$0x1f]
    %v276 = vmul.f32 %v273, %v274
    %v277 = vadd.f32 %v275, %v276
    %v278 = vlaneseq
    %vm279 = vcmp.ge.s32.totalorder %v278, 0
    %vm280 = vcmp.lt.s32.totalorder %v278, 640
    %vm281 = vmand %vm279, %vm280
    %282 = vst.msk [vmem:[#allocation2] sm:$0x1f] %vm281, %v277
    %v283 = vld [vmem:[#allocation3] sm:$0x1f]
    %vm284 = vcmp.gt.f32.partialorder %v274, 0.0
    %v285 = vsel %vm284, %v273, -inf
    %v286 = vmax.f32 %v283, %v285
    %287 = vst.msk [vmem:[#allocation3] sm:$0x1f] %vm281, %v286
    // Predicated region
    $region14: #{_forward.1} parent=1 // pred_check
      %p288 = pneg %p58
    $region15: #{_forward.1} parent=1 // pred_check_branch
      %290 = sbr.rel (%p288) target = $region17
    $region16: #{_forward.1} parent=1 // pred_region
      %v291 = vld [vmem:[#allocation2] sm:$0x1f]
      %v293 = vlaneseq
      %v294 = vshrl.u32 %v293, 7
      %v295 = vsub.s32 0, %v294
      %v296 = vrot.slane %v291, %v295
      %v297 = vlaneseq
      %v298 = vshrl.u32 %v297, 7
      %v299 = vsub.s32 1, %v298
      %v300 = vrot.slane %v291, %v299
      %v301 = vlaneseq
      %v302 = vshrl.u32 %v301, 7
      %v303 = vsub.s32 2, %v302
      %v304 = vrot.slane %v291, %v303
      %v305 = vlaneseq
      %v306 = vshrl.u32 %v305, 7
      %v307 = vsub.s32 3, %v306
      %v308 = vrot.slane %v291, %v307
      %v309 = vlaneseq
      %v310 = vshrl.u32 %v309, 7
      %v311 = vsub.s32 4, %v310
      %v312 = vrot.slane %v291, %v311
      %vm318 = vcmask 1040384
      %v319 = vsel %vm318, %v296, 0.0
      %v320 = vsel %vm318, %v300, 0.0
      %v321 = vadd.f32 %v319, %v320
      %v322 = vsel %vm318, %v304, 0.0
      %v323 = vadd.f32 %v321, %v322
      %v324 = vsel %vm318, %v308, 0.0
      %v325 = vadd.f32 %v323, %v324
      %v326 = vsel %vm318, %v312, 0.0
      %v327 = vadd.f32 %v325, %v326
      %328 = vadd.xlane.f32.xlu0 %v327
      %v329 = vpop.xlane.xlu0 %328
      %v330 = vrot.slane %v329, 4
      %v331 = vadd.f32 %v329, %v330
      %v332 = vrot.slane %v331, 2
      %v333 = vadd.f32 %v331, %v332
      %v334 = vrot.slane %v333, 1
      %v335 = vadd.f32 %v333, %v334
      %s336 = vtos %v335
      %v337 = vstv %s336
      %vm338 = vcmask 0
      %339 = vst.msk [vmem:[#allocation6] sm:$0x1] %vm338, %v337
      %v340 = vld [vmem:[#allocation3] sm:$0x1f]
      %v342 = vlaneseq
      %v343 = vshrl.u32 %v342, 7
      %v344 = vsub.s32 0, %v343
      %v345 = vrot.slane %v340, %v344
      %v346 = vlaneseq
      %v347 = vshrl.u32 %v346, 7
      %v348 = vsub.s32 1, %v347
      %v349 = vrot.slane %v340, %v348
      %v350 = vlaneseq
      %v351 = vshrl.u32 %v350, 7
      %v352 = vsub.s32 2, %v351
      %v353 = vrot.slane %v340, %v352
      %v354 = vlaneseq
      %v355 = vshrl.u32 %v354, 7
      %v356 = vsub.s32 3, %v355
      %v357 = vrot.slane %v340, %v356
      %v358 = vlaneseq
      %v359 = vshrl.u32 %v358, 7
      %v360 = vsub.s32 4, %v359
      %v361 = vrot.slane %v340, %v360
      %v367 = vsel %vm318, %v345, -inf
      %v368 = vsel %vm318, %v349, -inf
      %v369 = vsel %vm318, %v353, -inf
      %v370 = vsel %vm318, %v357, -inf
      %v371 = vsel %vm318, %v361, -inf
      %v372 = vmax.f32 %v367, %v371
      %v373 = vmax.f32 %v372, %v368
      %v374 = vmax.f32 %v369, %v370
      %v375 = vmax.f32 %v373, %v374
      %376 = vmax.xlane.f32.xlu0 %v375
      %v377 = vpop.xlane.xlu0 %376
      %v378 = vrot.slane %v377, 4
      %v379 = vmax.f32 %v377, %v378
      %v380 = vrot.slane %v379, 2
      %v381 = vmax.f32 %v379, %v380
      %v382 = vrot.slane %v381, 1
      %v383 = vmax.f32 %v381, %v382
      %s384 = vtos %v383
      %v385 = vstv %s384
      %386 = vst.msk [vmem:[#allocation8] sm:$0x1] %vm338, %v385
    $region17: #{_forward.1} parent=1 // pred_fallthru
      _
    // Predicated region
    $region18: #{_forward.1} parent=1 // pred_check
      _
    $region19: #{_forward.1} parent=1 // pred_check_branch
      %388 = sbr.rel (0) target = $region21
    $region20: #{_forward.1} parent=1 // pred_region
      %s390 = ssub.s32 16, 16
      %391 = vsyncadd [#allocation7], %s390
      %s393 = sshll.u32 [#allocation6], 4
      %s394 = int_to_ptr.vmem [resolvable:$true] %s393
      %396 = dma.vmem_to_hbm [thread:$0]  %s394, 16, %s3, [#allocation7]
    $region21: #{_forward.1} parent=1 // pred_fallthru
      _
    // Predicated region
    $region22: #{_forward.1} parent=1 // pred_check
      _
    $region23: #{_forward.1} parent=1 // pred_check_branch
      %398 = sbr.rel (0) target = $region25
    $region24: #{_forward.1} parent=1 // pred_region
      %s400 = ssub.s32 16, 16
      %401 = vsyncadd [#allocation9], %s400
      %s403 = sshll.u32 [#allocation8], 4
      %s404 = int_to_ptr.vmem [resolvable:$true] %s403
      %406 = dma.vmem_to_hbm [thread:$0]  %s404, 16, %s4, [#allocation9]
    $region25: #{_forward.1} parent=1 // pred_fallthru
      _
    // Predicated region
    $region26: #{_forward.1} parent=1 // pred_check
      _
    $region27: #{_forward.1} parent=1 // pred_check_branch
      %408 = sbr.rel (0) target = $region29
    $region28: #{_forward.1} parent=1 // pred_region
      %409 = dma.done [#allocation7], 16
    $region29: #{_forward.1} parent=1 // pred_fallthru
      _
    // Predicated region
    $region30: #{_forward.1} parent=1 // pred_check
      _
    $region31: #{_forward.1} parent=1 // pred_check_branch
      %411 = sbr.rel (0) target = $region33
    $region32: #{_forward.1} parent=1 // pred_region
      %412 = dma.done [#allocation9], 16
    $region33: #{_forward.1} parent=1 // pred_fallthru
      _
    %413 = vsyncpa [#allocation7], 1
    %414 = vsyncpa [#allocation9], 1

</llo_original>
